<compile_context>
chip_gen: v6e
topology: v6e:2x2x1
jax: 0.10.0
libtpu: 0.0.40
codegen_flags: <defaults>
</compile_context>

<pallas_src>
import functools
import math

import jax
import jax.numpy as jnp
from jax import lax
from jax.experimental import pallas as pl
from jax.experimental.pallas import tpu as pltpu

_INV_SQRT2 = 0.7071067811865476
_SUB = 16  # row-tile granularity (safe sublane multiple for f32 and bf16)


def _ffn_kernel(x_ref, w1_ref, b1_ref, w2_ref, b2_ref, o_ref, *scratch,
                acc_in_output, approx_gelu):
    k = pl.program_id(1)
    acc_ref = o_ref if acc_in_output else scratch[0]

    @pl.when(k == 0)
    def _init():
        # Fold b2 into the accumulator init (saves a full [tm, dim_out] pass).
        acc_ref[...] = jnp.broadcast_to(b2_ref[...], acc_ref.shape)

    # First matmul on the MXU with f32 accumulation; bias + GELU stay in f32.
    h = jnp.dot(x_ref[...], w1_ref[...], preferred_element_type=jnp.float32)
    h = h + b1_ref[...]
    if approx_gelu:
        # tanh approximation -> EUP slot; frees the VALU at small FFN widths.
        h = jax.nn.gelu(h, approximate=True)
    else:
        # Exact erf GELU (torch.nn.GELU default numerics).
        h = 0.5 * h * (1.0 + lax.erf(h * jnp.float32(_INV_SQRT2)))

    # Second matmul: accumulate this k-slice's contribution in f32.
    acc_ref[...] += jnp.dot(h.astype(w2_ref.dtype), w2_ref[...],
                            preferred_element_type=jnp.float32)

    if not acc_in_output:
        @pl.when(k == pl.num_programs(1) - 1)
        def _finalize():
            o_ref[...] = acc_ref[...].astype(o_ref.dtype)


def _round_up(x, m):
    return ((x + m - 1) // m) * m


def _cdiv(a, b):
    return (a + b - 1) // b


def _pick_k_tile(inner, k_target):
    """Largest multiple-of-128 divisor of `inner` that is <= k_target (else full)."""
    if inner <= k_target or inner % 128 != 0:
        # Robustness fallback only; at real FFN widths inner is a 128-multiple.
        return inner
    for mult in range(min(k_target, inner) // 128, 0, -1):
        tk = mult * 128
        if inner % tk == 0:
            return tk
    return inner


def _vmem_need(tm, tk, dim, inner, dim_out, bpe_c, out_bpe, use_scratch, w_bufs):
    need = (2 * tm * dim * bpe_c              # x tile (double-buffered)
            + w_bufs * dim * tk * bpe_c       # W1 k-slice
            + 2 * tk * 4                      # b1 k-slice (f32)
            + w_bufs * tk * dim_out * bpe_c   # W2 k-slice
            + 2 * dim_out * 4                 # b2 (f32)
            + 2 * tm * dim_out * out_bpe      # output tile
            + tm * tk * 4                     # materialized f32 GELU intermediate
            + tm * tk * bpe_c)                # its cast copy fed to the 2nd dot
    if use_scratch:
        need += tm * dim_out * 4              # f32 accumulator scratch
    return need


def _chip_config():
    """(generation, vmem_cap_bytes, row_target, k_target, want_two_row_tiles)."""
    kind = ""
    try:
        kind = jax.devices()[0].device_kind.lower()
    except Exception:
        pass
    vmem_phys = None
    try:
        vmem_phys = int(pltpu.get_tpu_info().vmem_capacity_bytes)
    except Exception:
        vmem_phys = None

    if ("v7" in kind) or ("tpu7" in kind):
        gen = "v7x"
    elif "v6" in kind:
        gen = "v6e"
    elif ("v5e" in kind) or ("v5 lite" in kind) or ("v5lite" in kind):
        gen = "v5e"
    else:
        gen = "other"

    if vmem_phys is None:
        vmem_phys = (64 << 20) if gen == "v7x" else (128 << 20)
    vmem_cap = int(0.80 * vmem_phys)  # headroom for compiler scratch

    # Row/k targets from the per-generation MXU/HBM roofline crossover.
    if gen == "v6e":
        row_target, k_target = 1024, 512
    elif gen == "v7x":
        row_target, k_target = 512, 256
    elif gen == "v5e":
        row_target, k_target = 256, 512
    else:
        row_target, k_target = 512, 512
    return gen, vmem_cap, row_target, k_target, (gen == "v7x")


@functools.partial(
    jax.jit,
    static_argnames=("row_tile", "k_tile", "compute_dtype", "gelu_approximate",
                     "deep_weight_buffering"))
def feed_forward(x, w1, b1, w2, b2, *, row_tile=None, k_tile=None,
                 compute_dtype=jnp.bfloat16, gelu_approximate=False,
                 deep_weight_buffering=True):
    """x: [B, S, dim]; w1: [dim, inner]; b1: [inner]; w2: [inner, dim_out]; b2: [dim_out].

    compute_dtype: dtype for the MXU operands (default bf16 — native MXU rate on
    v6e/v7x and half the weight DMA bytes); accumulation and the GELU stay in
    float32 and the output keeps x's original dtype.
    """
    orig_dtype = x.dtype
    B, S, dim = x.shape
    inner = w1.shape[1]
    dim_out = w2.shape[1]
    rows = B * S

    _, vmem_cap, row_target, k_target, two_row_tiles = _chip_config()
    if row_tile is not None:
        row_target = int(row_tile)
    if k_tile is not None:
        k_target = int(k_tile)

    # TODO(synk): optional fp8 weight path for v7x's native fp8 MXU not implemented.
    if compute_dtype is not None:
        if x.dtype != compute_dtype:
            x = x.astype(compute_dtype)
        w1 = w1.astype(compute_dtype)
        w2 = w2.astype(compute_dtype)
    b1_2d = b1.astype(jnp.float32).reshape(1, inner)
    b2_2d = b2.astype(jnp.float32).reshape(1, dim_out)

    # No activation padding: the grid uses cdiv(rows, tm) and Pallas clips the
    # ragged last row block (OOB reads only feed rows that are never written back).
    x2d = x.reshape(rows, dim)
    bpe_c = jnp.dtype(x2d.dtype).itemsize
    out_bpe = jnp.dtype(orig_dtype).itemsize
    acc_in_output = jnp.dtype(orig_dtype) == jnp.dtype(jnp.float32)
    use_scratch = not acc_in_output

    # ---- tile selection ----
    rows_r = _round_up(max(rows, 1), _SUB)
    tm = max(_SUB, min(_round_up(row_target, _SUB), rows_r))
    if two_row_tiles and rows_r >= 2 * _SUB and _cdiv(rows, tm) < 2:
        # Give v7x's second TensorCore a row tile even for small row counts.
        tm = max(_SUB, _round_up(_cdiv(rows_r, 2), _SUB))
    tk = _pick_k_tile(inner, k_target)

    # Shrink tiles until the working set (incl. GELU intermediate) fits the cap.
    for _ in range(32):
        if _vmem_need(tm, tk, dim, inner, dim_out, bpe_c, out_bpe,
                      use_scratch, 2) <= vmem_cap:
            break
        if tk > 128 and inner % 128 == 0:
            new_tk = _pick_k_tile(inner, tk // 2)
            if new_tk < tk:
                tk = new_tk
                continue
        if tm > _SUB:
            tm = max(_SUB, _round_up(tm // 2, _SUB))
            continue
        break

    grid_m = _cdiv(rows, tm)
    grid_k = inner // tk
    need = _vmem_need(tm, tk, dim, inner, dim_out, bpe_c, out_bpe, use_scratch, 2)

    # Deeper buffering on the weight streams (their block index changes every k
    # step) when the reduction is tiled and the extra slice fits the budget.
    w_deep = (deep_weight_buffering and grid_k >= 2 and hasattr(pl, "Buffered")
              and _vmem_need(tm, tk, dim, inner, dim_out, bpe_c, out_bpe,
                             use_scratch, 3) <= vmem_cap)

    def _wspec(shape, index_map):
        if w_deep:
            try:
                return pl.BlockSpec(shape, index_map, pipeline_mode=pl.Buffered(3))
            except TypeError:
                pass
        return pl.BlockSpec(shape, index_map)

    in_specs = [
        pl.BlockSpec((tm, dim), lambda i, k: (i, 0)),        # x row tile
        _wspec((dim, tk), lambda i, k: (0, k)),              # W1 k-slice
        pl.BlockSpec((1, tk), lambda i, k: (0, k)),          # b1 k-slice
        _wspec((tk, dim_out), lambda i, k: (k, 0)),          # W2 k-slice
        pl.BlockSpec((1, dim_out), lambda i, k: (0, 0)),     # b2
    ]
    out_spec = pl.BlockSpec((tm, dim_out), lambda i, k: (i, 0))
    scratch_shapes = ([] if acc_in_output
                      else [pltpu.VMEM((tm, dim_out), jnp.float32)])

    vmem_limit = int(min(vmem_cap, max(32 << 20, need + (8 << 20))))

    # Weights are re-streamed once per row tile -> scale their bytes by grid_m.
    cost = pl.CostEstimate(
        flops=2 * rows * dim * inner + 2 * rows * inner * dim_out,
        transcendentals=rows * inner,
        bytes_accessed=(rows * dim * bpe_c
                        + grid_m * (dim * inner + inner * dim_out) * bpe_c
                        + inner * 4 + dim_out * 4
                        + rows * dim_out * out_bpe),
    )

    kernel = functools.partial(_ffn_kernel, acc_in_output=acc_in_output,
                               approx_gelu=gelu_approximate)

    out2d = pl.pallas_call(
        kernel,
        out_shape=jax.ShapeDtypeStruct((rows, dim_out), orig_dtype),
        grid_spec=pltpu.PrefetchScalarGridSpec(
            num_scalar_prefetch=0,
            grid=(grid_m, grid_k),
            in_specs=in_specs,
            out_specs=out_spec,
            scratch_shapes=scratch_shapes,
        ),
        compiler_params=pltpu.CompilerParams(
            dimension_semantics=("parallel", "arbitrary"),
            vmem_limit_bytes=vmem_limit,
        ),
        cost_estimate=cost,
    )(x2d, w1, b1_2d, w2, b2_2d)

    return out2d.reshape(B, S, dim_out)


def init_params(key, dim, mult=4, dim_out=None, dtype=jnp.float32):
    """nn.Linear-style uniform(+/- 1/sqrt(fan_in)) init; weights stored [in, out]."""
    if dim_out is None:
        dim_out = dim
    inner = int(dim * mult)
    k1, k2, k3, k4 = jax.random.split(key, 4)
    bound1 = 1.0 / math.sqrt(dim)
    bound2 = 1.0 / math.sqrt(inner)
    w1 = jax.random.uniform(k1, (dim, inner), dtype, -bound1, bound1)
    b1 = jax.random.uniform(k2, (inner,), dtype, -bound1, bound1)
    w2 = jax.random.uniform(k3, (inner, dim_out), dtype, -bound2, bound2)
    b2 = jax.random.uniform(k4, (dim_out,), dtype, -bound2, bound2)
    return w1, b1, w2, b2


def _reference(x, w1, b1, w2, b2, compute_dtype=jnp.bfloat16, gelu_approximate=False):
    """Plain-JAX reference applying the same casts / rounding as the kernel."""
    if compute_dtype is not None:
        x = x.astype(compute_dtype)
        w1 = w1.astype(compute_dtype)
        w2 = w2.astype(compute_dtype)
    h = jnp.dot(x, w1, preferred_element_type=jnp.float32) + b1.astype(jnp.float32)
    if gelu_approximate:
        h = jax.nn.gelu(h, approximate=True)
    else:
        h = 0.5 * h * (1.0 + lax.erf(h * jnp.float32(_INV_SQRT2)))
    out = jnp.dot(h.astype(w2.dtype), w2, preferred_element_type=jnp.float32)
    return out + b2.astype(jnp.float32)


if __name__ == "__main__":
    key = jax.random.PRNGKey(0)
    kx1, kp1, kx2, kp2, kx3, kp3 = jax.random.split(key, 6)

    # Test 1: default path — bf16 MXU operands, exact erf GELU, f32 output
    # (accumulates directly into the resident output block, no scratch).
    # FeedForward(dim=32, mult=4) -> inner=128, dim_out=32.
    B, S, dim, mult = 2, 8, 32, 4
    x = jax.random.normal(kx1, (B, S, dim), jnp.float32)
    w1, b1, w2, b2 = init_params(kp1, dim, mult=mult)
    out = jax.block_until_ready(feed_forward(x, w1, b1, w2, b2))
    ref = _reference(x, w1, b1, w2, b2, compute_dtype=jnp.bfloat16)
    assert out.shape == (B, S, dim) and out.dtype == jnp.float32
    assert jnp.allclose(out, ref, atol=1e-2, rtol=1e-2), "bf16 default path mismatch"

    # Test 2: f32 MXU path, tanh GELU, ragged rows (40 rows with tm=32 ->
    # clipped last row block, no jnp.pad) and a k-tiled reduction
    # (inner=256 -> two 128-wide k-steps) with deep weight buffering.
    B2, S2, dim2, mult2 = 2, 20, 64, 4
    x2 = jax.random.normal(kx2, (B2, S2, dim2), jnp.float32)
    p2 = init_params(kp2, dim2, mult=mult2)
    out2 = jax.block_until_ready(
        feed_forward(x2, *p2, row_tile=32, k_tile=128,
                     compute_dtype=jnp.float32, gelu_approximate=True))
    ref2 = _reference(x2, *p2, compute_dtype=jnp.float32, gelu_approximate=True)
    assert out2.shape == (B2, S2, dim2)
    assert jnp.allclose(out2, ref2, atol=1e-3, rtol=1e-3), "f32 path mismatch"

    # Test 3: bf16 activations end-to-end (bf16 output -> f32 scratch
    # accumulator + finalize cast path).
    B3, S3, dim3 = 2, 16, 32
    x3 = jax.random.normal(kx3, (B3, S3, dim3), jnp.float32).astype(jnp.bfloat16)
    p3 = init_params(kp3, dim3, mult=4, dtype=jnp.bfloat16)
    out3 = jax.block_until_ready(feed_forward(x3, *p3))
    ref3 = _reference(x3, *p3, compute_dtype=jnp.bfloat16)
    assert out3.shape == (B3, S3, dim3) and out3.dtype == jnp.bfloat16
    assert jnp.allclose(out3.astype(jnp.float32), ref3, atol=3e-2, rtol=3e-2), \
        "bf16 output path mismatch"

    print("KERNEL_OK")
</pallas_src>

<mosaic_0001>
module attributes {stable_mosaic.version = 11 : i64} {
  func.func @_ffn_kernel(%arg0: i32, %arg1: i32, %arg2: memref<16x32xbf16, #tpu.memory_space<vmem>>, %arg3: memref<32x128xbf16, #tpu.memory_space<vmem>>, %arg4: memref<1x128xf32, #tpu.memory_space<vmem>>, %arg5: memref<128x32xbf16, #tpu.memory_space<vmem>>, %arg6: memref<1x32xf32, #tpu.memory_space<vmem>>, %arg7: memref<16x32xf32, #tpu.memory_space<vmem>>) attributes {dimension_semantics = [#tpu.dimension_semantics<parallel>, #tpu.dimension_semantics<arbitrary>], iteration_bounds = array<i64: 1, 1>, scalar_prefetch = 0 : i64, scratch_operands = 0 : i64, tpu.core_type = #tpu.core_type<tc>, window_params = [{transform_indices = @transform_0, window_bounds = array<i64: 16, 32>}, {transform_indices = @transform_1, window_bounds = array<i64: 32, 128>}, {transform_indices = @transform_2, window_bounds = array<i64: 1, 128>}, {transform_indices = @transform_3, window_bounds = array<i64: 128, 32>}, {pipeline_mode = #tpu.pipeline_mode<synchronous>, transform_indices = @transform_4, window_bounds = array<i64: 1, 32>}, {transform_indices = @transform_5, window_bounds = array<i64: 16, 32>}]} {
    %c0_i32 = arith.constant 0 : i32
    %0 = arith.cmpi eq, %arg1, %c0_i32 : i32
    %1 = arith.extui %0 : i1 to i32
    %c0_i32_0 = arith.constant 0 : i32
    %2 = arith.cmpi ne, %1, %c0_i32_0 : i32
    scf.if %2 {
      %c0_16 = arith.constant 0 : index
      %c0_17 = arith.constant 0 : index
      %23 = vector.load %arg6[%c0_16, %c0_17] : memref<1x32xf32, #tpu.memory_space<vmem>>, vector<1x32xf32>
      %24 = vector.shape_cast %23 : vector<1x32xf32> to vector<1x32xf32>
      %25 = vector.broadcast %24 : vector<1x32xf32> to vector<16x32xf32>
      %c0_18 = arith.constant 0 : index
      %c0_19 = arith.constant 0 : index
      %26 = vector.load %arg7[%c0_18, %c0_19] : memref<16x32xf32, #tpu.memory_space<vmem>>, vector<16x32xf32>
      tpu.vector_store %arg7[%c0_18, %c0_19], %25 {strides = array<i32>} : memref<16x32xf32, #tpu.memory_space<vmem>>, vector<16x32xf32>,
    } else {
    }
    %c0 = arith.constant 0 : index
    %c0_1 = arith.constant 0 : index
    %3 = vector.load %arg2[%c0, %c0_1] : memref<16x32xbf16, #tpu.memory_space<vmem>>, vector<16x32xbf16>
    %c0_2 = arith.constant 0 : index
    %c0_3 = arith.constant 0 : index
    %4 = vector.load %arg3[%c0_2, %c0_3] : memref<32x128xbf16, #tpu.memory_space<vmem>>, vector<32x128xbf16>
    %cst = arith.constant dense<0.000000e+00> : vector<16x128xf32>
    %5 = tpu.matmul %3, %4, %cst {dimension_numbers = #tpu.dot_dimension_numbers<[1], [0], [0], [1], [0, 0, 1, 1], [], []>} : vector<16x32xbf16>, vector<32x128xbf16>, vector<16x128xf32> -> vector<16x128xf32>
    %c0_4 = arith.constant 0 : index
    %c0_5 = arith.constant 0 : index
    %6 = vector.load %arg4[%c0_4, %c0_5] : memref<1x128xf32, #tpu.memory_space<vmem>>, vector<1x128xf32>
    %7 = vector.broadcast %6 : vector<1x128xf32> to vector<16x128xf32>
    %8 = arith.addf %5, %7 : vector<16x128xf32>
    %cst_6 = arith.constant 5.000000e-01 : f32
    %9 = vector.broadcast %cst_6 : f32 to vector<16x128xf32>
    %10 = arith.mulf %9, %8 : vector<16x128xf32>
    %cst_7 = arith.constant 0.707106769 : f32
    %11 = vector.broadcast %cst_7 : f32 to vector<16x128xf32>
    %12 = arith.mulf %8, %11 : vector<16x128xf32>
    %13 = math.erf %12 : vector<16x128xf32>
    %cst_8 = arith.constant 1.000000e+00 : f32
    %14 = vector.broadcast %cst_8 : f32 to vector<16x128xf32>
    %15 = arith.addf %14, %13 : vector<16x128xf32>
    %16 = arith.mulf %10, %15 : vector<16x128xf32>
    %c0_9 = arith.constant 0 : index
    %c0_10 = arith.constant 0 : index
    %17 = vector.load %arg7[%c0_9, %c0_10] : memref<16x32xf32, #tpu.memory_space<vmem>>, vector<16x32xf32>
    %18 = arith.truncf %16 : vector<16x128xf32> to vector<16x128xbf16>
    %c0_11 = arith.constant 0 : index
    %c0_12 = arith.constant 0 : index
    %19 = vector.load %arg5[%c0_11, %c0_12] : memref<128x32xbf16, #tpu.memory_space<vmem>>, vector<128x32xbf16>
    %cst_13 = arith.constant dense<0.000000e+00> : vector<16x32xf32>
    %20 = tpu.matmul %18, %19, %cst_13 {dimension_numbers = #tpu.dot_dimension_numbers<[1], [0], [0], [1], [0, 0, 1, 1], [], []>} : vector<16x128xbf16>, vector<128x32xbf16>, vector<16x32xf32> -> vector<16x32xf32>
    %21 = arith.addf %17, %20 : vector<16x32xf32>
    %c0_14 = arith.constant 0 : index
    %c0_15 = arith.constant 0 : index
    %22 = vector.load %arg7[%c0_14, %c0_15] : memref<16x32xf32, #tpu.memory_space<vmem>>, vector<16x32xf32>
    tpu.vector_store %arg7[%c0_14, %c0_15], %21 {strides = array<i32>} : memref<16x32xf32, #tpu.memory_space<vmem>>, vector<16x32xf32>,
    return
  }
  func.func @transform_0(%arg0: i32, %arg1: i32) -> (i32, i32) {
    %c0_i32 = arith.constant 0 : i32
    %c0_i32_0 = arith.constant 0 : i32
    return %arg0, %c0_i32 : i32, i32
  }
  func.func @transform_1(%arg0: i32, %arg1: i32) -> (i32, i32) {
    %c0_i32 = arith.constant 0 : i32
    %c0_i32_0 = arith.constant 0 : i32
    return %c0_i32, %arg1 : i32, i32
  }
  func.func @transform_2(%arg0: i32, %arg1: i32) -> (i32, i32) {
    %c0_i32 = arith.constant 0 : i32
    %c0_i32_0 = arith.constant 0 : i32
    return %c0_i32, %arg1 : i32, i32
  }
  func.func @transform_3(%arg0: i32, %arg1: i32) -> (i32, i32) {
    %c0_i32 = arith.constant 0 : i32
    %c0_i32_0 = arith.constant 0 : i32
    return %arg1, %c0_i32 : i32, i32
  }
  func.func @transform_4(%arg0: i32, %arg1: i32) -> (i32, i32) {
    %c0_i32 = arith.constant 0 : i32
    %c0_i32_0 = arith.constant 0 : i32
    %c0_i32_1 = arith.constant 0 : i32
    return %c0_i32, %c0_i32_0 : i32, i32
  }
  func.func @transform_5(%arg0: i32, %arg1: i32) -> (i32, i32) {
    %c0_i32 = arith.constant 0 : i32
    %c0_i32_0 = arith.constant 0 : i32
    return %arg0, %c0_i32 : i32, i32
  }
}

</mosaic_0001>

<llo_original>
// kernel: feed_forward.1
$region0: #{feed_forward.1}
  #allocation0 [shape = 'u32[]', space=smem, size = 0x4, offset = 0x4, fixed_abs, tag = 'smem constant byte address 0x4 - core index']
  #allocation1 [shape = 'u32[144,128]{1,0:T(1,128)}', space=vmem, size = 0x12000, scoped, tag = 'internal scratch']
  %s0 = inlined_call_operand.vmem [shape: bf16[16,32], index: 0, kind: input, shape index: {}]
  %s1 = inlined_call_operand.vmem [shape: bf16[32,128], index: 1, kind: input, shape index: {}]
  %s2 = inlined_call_operand.vmem [shape: f32[1,128], index: 2, kind: input, shape index: {}]
  %s3 = inlined_call_operand.vmem [shape: bf16[128,32], index: 3, kind: input, shape index: {}]
  %s4 = inlined_call_operand.vmem [shape: f32[1,32], index: 4, kind: input, shape index: {}]
  %s5 = inlined_call_operand.hbm [shape: f32[16,32], index: 5, kind: output, shape index: {}]
  %s6 = sld [smem:[#allocation0]]
  $region34: #{feed_forward.1} parent=0
    _
  %s8 = ssub.s32 1, %s6
  %s9 = scalar_select 0, %s8, %s6
  $region1: #{feed_forward.1} parent=0
    #allocation2 [shape = 'u8[8192]{0}', space=vmem, size = 0x2000, scoped, tag = 'output window, operand 0, single buffered']
    #allocation3 [shape = 's32[1]{0}', space=sflag, size = 0x4, scoped, tag = 'scoped memory for feed_forward.1']
    %10 = vsyncpa [#allocation3], 0
    // Predicated region
    $region2: #{feed_forward.1} parent=1 // pred_check
      _
    $region3: #{feed_forward.1} parent=1 // pred_check_branch
      %12 = sbr.rel (0) target = $region5
    $region4: #{feed_forward.1} parent=1 // pred_region
      _
    $region5: #{feed_forward.1} parent=1 // pred_fallthru
      _
    // Predicated region
    $region6: #{feed_forward.1} parent=1 // pred_check
      _
    $region7: #{feed_forward.1} parent=1 // pred_check_branch
      %14 = sbr.rel (0) target = $region9
    $region8: #{feed_forward.1} parent=1 // pred_region
      _
    $region9: #{feed_forward.1} parent=1 // pred_fallthru
      _
    // Predicated region
    $region10: #{feed_forward.1} parent=1 // pred_check
      _
    $region11: #{feed_forward.1} parent=1 // pred_check_branch
      %16 = sbr.rel (0) target = $region13
    $region12: #{feed_forward.1} parent=1 // pred_region
      _
    $region13: #{feed_forward.1} parent=1 // pred_fallthru
      _
    // Predicated region
    $region14: #{feed_forward.1} parent=1 // pred_check
      _
    $region15: #{feed_forward.1} parent=1 // pred_check_branch
      %18 = sbr.rel (0) target = $region17
    $region16: #{feed_forward.1} parent=1 // pred_region
      _
    $region17: #{feed_forward.1} parent=1 // pred_fallthru
      _
    // Predicated region
    $region18: #{feed_forward.1} parent=1 // pred_check
      _
    $region19: #{feed_forward.1} parent=1 // pred_check_branch
      %20 = sbr.rel (0) target = $region21
    $region20: #{feed_forward.1} parent=1 // pred_region
      _
    $region21: #{feed_forward.1} parent=1 // pred_fallthru
      _
    %p22 = scmp.eq.s32.totalorder 0, 0
    // Predicated region
    $region22: #{feed_forward.1} parent=1 // pred_check
      %p23 = pneg %p22
    $region23: #{feed_forward.1} parent=1 // pred_check_branch
      %25 = sbr.rel (%p23) target = $region25
    $region24: #{feed_forward.1} parent=1 // pred_region
      %v26 = vld [vmem:[%s4] sm:$0x1]
      %v28 = vlaneseq
      %v29 = vshrl.u32 %v28, 7
      %v30 = vsub.s32 0, %v29
      %v31 = vrot.slane %v26, %v30
      %vm33 = vcmask 261120
      %34 = vst.msk [vmem:[#allocation2] sm:$0xff] %vm33, %v31
      %35 = vst.msk [vmem:[#allocation2 + $0x8] sm:$0xff] %vm33, %v31
    $region25: #{feed_forward.1} parent=1 // pred_fallthru
      _
    %v36 = vld [vmem:[%s0] sm:$0xf]
    %v37 = vld [vmem:[%s0 + $0x4] sm:$0xf]
    %v38 = vld [vmem:[%s1] sm:$0xf]
    %v39 = vld [vmem:[%s1 + $0x4] sm:$0xf]
    %v40 = vld [vmem:[%s1 + $0x8] sm:$0xf]
    %v41 = vld [vmem:[%s1 + $0xc] sm:$0xf]
    %v42 = vld [vmem:[%s2] sm:$0x1]
    %v44 = vlaneseq
    %v45 = vshrl.u32 %v44, 7
    %v46 = vsub.s32 0, %v45
    %v47 = vrot.slane %v42, %v46
    %v51 = vunpack.c.l.b16 %v36
    %v52 = vunpack.c.l.b16 %v37
    %v53 = vpack.c.b16 %v52, %v51
    %v58 = vunpack.c.l.b16 %v38
    %v59 = vunpack.c.l.b16 %v39
    %v60 = vunpack.c.l.b16 %v40
    %v61 = vunpack.c.l.b16 %v41
    %v62 = vpack.c.b16 %v59, %v58
    %v63 = vpack.c.b16 %v61, %v60
    %vm66 = vcmask 261120
    %v68 = vsel %vm66, %v53, 0
    %70 = vmatprep.subr.bf16.mxu0 0
    %71 = vmatpush1.bf16.msra.mxu0 0
    %72 = vmatprep.subr.bf16.mxu0 0
    %73 = vmatpush1.bf16.msra.mxu0 0
    %74 = vmatprep.subr.bf16.mxu0 0
    %75 = vmatpush1.bf16.msra.mxu0 0
    %76 = vmatprep.subr.bf16.mxu0 0
    %77 = vmatpush1.bf16.msra.mxu0 0
    %78 = vmatprep.subr.bf16.mxu0 0
    %79 = vmatpush1.bf16.msra.mxu0 0
    %80 = vmatprep.subr.bf16.mxu0 0
    %81 = vmatpush1.bf16.msra.mxu0 0
    %82 = vmatprep.subr.bf16.mxu0 0
    %83 = vmatpush1.bf16.msra.mxu0 %v63
    %84 = vmatprep.subr.bf16.mxu0 0
    %85 = vmatpush1.bf16.msra.mxu0 %v62
    %86 = vmatprep.subr.bf16.mxu0 0
    %87 = vmatpush2.bf16.msra.mxu0 0
    %88 = vmatprep.subr.bf16.mxu0 0
    %89 = vmatpush2.bf16.msra.mxu0 0
    %90 = vmatprep.subr.bf16.mxu0 0
    %91 = vmatpush2.bf16.msra.mxu0 0
    %92 = vmatprep.subr.bf16.mxu0 0
    %93 = vmatpush2.bf16.msra.mxu0 0
    %94 = vmatprep.subr.bf16.mxu0 0
    %95 = vmatpush2.bf16.msra.mxu0 0
    %96 = vmatprep.subr.bf16.mxu0 0
    %97 = vmatpush2.bf16.msra.mxu0 0
    %98 = vmatprep.subr.bf16.mxu0 0
    %99 = vmatpush2.bf16.msra.mxu0 0
    %100 = vmatprep.subr.bf16.mxu0 0
    %101 = vmatpush2.bf16.msra.mxu0 0
    %102 = vmatprep.mubr.bf16.mxu0 0
    %103 = vmatmul.mubr.bf16.gmra.mxu0 %v68
    %v104 = vpop.f32.mrf.mxu0
    %v105 = vadd.f32 %v47, %v104
    %v106 = vpop.f32.mrf.mxu0
    %v107 = vpop.f32.mrf.mxu0
    %v108 = vadd.f32 %v47, %v107
    %v109 = vpop.f32.mrf.mxu0
    %110 = vdwg.mxu0
    %v111 = vmul.f32 %v105, 0.5
    %v112 = vmul.f32 %v108, 0.5
    %v113 = vmul.f32 %v105, 0.70710677
    %v114 = vmul.f32 %v108, 0.70710677
    %v115 = verf.f32.pop %v113
    %v116 = verf.f32.pop %v114
    %v117 = vadd.f32 %v115, 1.0
    %v118 = vadd.f32 %v116, 1.0
    %v119 = vmul.f32 %v111, %v117
    %v120 = vmul.f32 %v112, %v118
    %v121 = vld [vmem:[#allocation2] sm:$0xff]
    %v122 = vld [vmem:[#allocation2 + $0x8] sm:$0xff]
    %v123 = vpack.c.bf16 %v120, %v119
    %v124 = vld [vmem:[%s3] sm:$0xf]
    %v125 = vld [vmem:[%s3 + $0x4] sm:$0xf]
    %v126 = vld [vmem:[%s3 + $0x8] sm:$0xf]
    %v127 = vld [vmem:[%s3 + $0xc] sm:$0xf]
    %v128 = vld [vmem:[%s3 + $0x10] sm:$0xf]
    %v129 = vld [vmem:[%s3 + $0x14] sm:$0xf]
    %v130 = vld [vmem:[%s3 + $0x18] sm:$0xf]
    %v131 = vld [vmem:[%s3 + $0x1c] sm:$0xf]
    %v132 = vld [vmem:[%s3 + $0x20] sm:$0xf]
    %v133 = vld [vmem:[%s3 + $0x24] sm:$0xf]
    %v134 = vld [vmem:[%s3 + $0x28] sm:$0xf]
    %v135 = vld [vmem:[%s3 + $0x2c] sm:$0xf]
    %v136 = vld [vmem:[%s3 + $0x30] sm:$0xf]
    %v137 = vld [vmem:[%s3 + $0x34] sm:$0xf]
    %v138 = vld [vmem:[%s3 + $0x38] sm:$0xf]
    %v139 = vld [vmem:[%s3 + $0x3c] sm:$0xf]
    %v156 = vunpack.c.l.b16 %v124
    %v157 = vunpack.c.l.b16 %v125
    %v158 = vunpack.c.l.b16 %v126
    %v159 = vunpack.c.l.b16 %v127
    %v160 = vunpack.c.l.b16 %v128
    %v161 = vunpack.c.l.b16 %v129
    %v162 = vunpack.c.l.b16 %v130
    %v163 = vunpack.c.l.b16 %v131
    %v164 = vunpack.c.l.b16 %v132
    %v165 = vunpack.c.l.b16 %v133
    %v166 = vunpack.c.l.b16 %v134
    %v167 = vunpack.c.l.b16 %v135
    %v168 = vunpack.c.l.b16 %v136
    %v169 = vunpack.c.l.b16 %v137
    %v170 = vunpack.c.l.b16 %v138
    %v171 = vunpack.c.l.b16 %v139
    %v172 = vpack.c.b16 %v157, %v156
    %v173 = vpack.c.b16 %v159, %v158
    %v174 = vpack.c.b16 %v161, %v160
    %v175 = vpack.c.b16 %v163, %v162
    %v176 = vpack.c.b16 %v165, %v164
    %v177 = vpack.c.b16 %v167, %v166
    %v178 = vpack.c.b16 %v169, %v168
    %v179 = vpack.c.b16 %v171, %v170
    %188 = vmatprep.subr.bf16.mxu0 0
    %189 = vmatpush1.bf16.msra.mxu0 %v179
    %190 = vmatprep.subr.bf16.mxu0 0
    %191 = vmatpush1.bf16.msra.mxu0 %v178
    %192 = vmatprep.subr.bf16.mxu0 0
    %193 = vmatpush1.bf16.msra.mxu0 %v177
    %194 = vmatprep.subr.bf16.mxu0 0
    %195 = vmatpush1.bf16.msra.mxu0 %v176
    %196 = vmatprep.subr.bf16.mxu0 0
    %197 = vmatpush1.bf16.msra.mxu0 %v175
    %198 = vmatprep.subr.bf16.mxu0 0
    %199 = vmatpush1.bf16.msra.mxu0 %v174
    %200 = vmatprep.subr.bf16.mxu0 0
    %201 = vmatpush1.bf16.msra.mxu0 %v173
    %202 = vmatprep.subr.bf16.mxu0 0
    %203 = vmatpush1.bf16.msra.mxu0 %v172
    %204 = vmatprep.subr.bf16.mxu0 0
    %205 = vmatpush2.bf16.msra.mxu0 0
    %206 = vmatprep.subr.bf16.mxu0 0
    %207 = vmatpush2.bf16.msra.mxu0 0
    %208 = vmatprep.subr.bf16.mxu0 0
    %209 = vmatpush2.bf16.msra.mxu0 0
    %210 = vmatprep.subr.bf16.mxu0 0
    %211 = vmatpush2.bf16.msra.mxu0 0
    %212 = vmatprep.subr.bf16.mxu0 0
    %213 = vmatpush2.bf16.msra.mxu0 0
    %214 = vmatprep.subr.bf16.mxu0 0
    %215 = vmatpush2.bf16.msra.mxu0 0
    %216 = vmatprep.subr.bf16.mxu0 0
    %217 = vmatpush2.bf16.msra.mxu0 0
    %218 = vmatprep.subr.bf16.mxu0 0
    %219 = vmatpush2.bf16.msra.mxu0 0
    %220 = vmatprep.mubr.bf16.mxu0 0
    %221 = vmatmul.mubr.bf16.gmra.mxu0 %v123
    %v222 = vpop.f32.mrf.mxu0
    %v223 = vadd.f32 0.0, %v222
    %v224 = vpop.f32.mrf.mxu0
    %v225 = vpop.f32.mrf.mxu0
    %v226 = vadd.f32 0.0, %v225
    %v227 = vpop.f32.mrf.mxu0
    %228 = vdwg.mxu0
    %v229 = vadd.f32 %v121, %v223
    %v230 = vadd.f32 %v122, %v226
    %231 = vst.msk [vmem:[#allocation2] sm:$0xff] %vm66, %v229
    %232 = vst.msk [vmem:[#allocation2 + $0x8] sm:$0xff] %vm66, %v230
    // Predicated region
    $region26: #{feed_forward.1} parent=1 // pred_check
      _
    $region27: #{feed_forward.1} parent=1 // pred_check_branch
      %234 = sbr.rel (0) target = $region29
    $region28: #{feed_forward.1} parent=1 // pred_region
      %s236 = ssub.s32 256, 256
      %237 = vsyncadd [#allocation3], %s236
      %s238 = sshll.u32 [#allocation2], 4
      %s239 = int_to_ptr.vmem [resolvable:$true] %s238
      %244 = dma.vmem_to_hbm [thread:$0]  %s239, 256, %s5, [#allocation3], 128, 128, 8
    $region29: #{feed_forward.1} parent=1 // pred_fallthru
      _
    // Predicated region
    $region30: #{feed_forward.1} parent=1 // pred_check
      _
    $region31: #{feed_forward.1} parent=1 // pred_check_branch
      %246 = sbr.rel (0) target = $region33
    $region32: #{feed_forward.1} parent=1 // pred_region
      %247 = dma.done [#allocation3], 256
    $region33: #{feed_forward.1} parent=1 // pred_fallthru
      _
    %248 = vsyncpa [#allocation3], 1

</llo_original>
